<compile_context>
chip_gen: v5e
topology: v5e:2x2
jax: 0.10.0
libtpu: 0.0.40
codegen_flags: <defaults>
</compile_context>

<pallas_src>
import jax
import jax.numpy as jnp
from jax import lax
from jax.experimental import pallas as pl
from jax.experimental.pallas import tpu as pltpu


def _make_time2vec_kernel(P: int, D_pad: int, out_dtype):
    def kernel(tau_ref, w_ref, b_ref, out_ref):
        # tau_ref: (TN, P) f32   w_ref: (P, PD) f32   b_ref: (1, PD) f32
        # out_ref: (TN, PD) out_dtype
        PD = out_ref.shape[-1]

        if P == 1:
            # Degenerate packing: plain lane-broadcast multiply on the VPU.
            lin = tau_ref[...] * w_ref[...] + b_ref[...]
        else:
            # One MXU dot performs both the "repeat tau into its D_pad-lane
            # group" expansion and the per-channel scale.
            lin = jnp.dot(tau_ref[...], w_ref[...],
                          preferred_element_type=jnp.float32) + b_ref[...]

        lane = lax.broadcasted_iota(jnp.int32, (1, PD), 1)
        if P == 1:
            is_linear = lane == 0
        else:
            # D_pad is a power of two whenever P > 1 (it divides 128).
            is_linear = (lane & (D_pad - 1)) == 0

        out_ref[...] = jnp.where(is_linear, lin, jnp.sin(lin)).astype(out_dtype)

    return kernel


def _pick_tile(n: int, preferred: int) -> int:
    """Largest tile <= preferred dividing n with tile % 8 == 0 (else n itself),
    then split further so the grid has >= 2 steps when alignment allows."""
    if n <= preferred:
        t = n
    else:
        t = n
        for cand in range(preferred, 0, -1):
            if n % cand == 0 and cand % 8 == 0:
                t = cand
                break
    # Prefer >= 2 grid steps so v7x's two TensorCores both get work.
    while n // t < 2 and t % 2 == 0 and (t // 2) % 8 == 0 and n % (t // 2) == 0:
        t //= 2
    return t


def time2vec(tau, w0, b0, w, b, *, out_dtype=jnp.float32, tn_pref: int = 8192):
    """tau: (B, S). w0: (1,1), b0: (1,), w: (1, D-1), b: (D-1,). Returns (B, S, D)."""
    B, S = tau.shape
    D = w.shape[-1] + 1

    # Padded channel count so the packed output row is exactly lane-dense.
    if D <= 128:
        D_pad = int(pl.next_power_of_2(D))
    else:
        D_pad = 128 * int(pl.cdiv(D, 128))

    # Pack P consecutive time steps per 128-lane output row.
    P = 1
    if D_pad <= 128:
        for p in range(128 // D_pad, 0, -1):
            if S % p == 0:
                P = p
                break
    PD = P * D_pad
    SP = S // P
    N = B * SP

    f32 = jnp.float32
    tau_f = tau.astype(f32).reshape(N, P)  # contiguous, metadata-only

    # Pack the linear channel with the periodic ones, pad to D_pad, and build
    # the expansion matrix once in the wrapper (hoisted, constant index_map).
    w_full = jnp.concatenate([w0.reshape(1), w.reshape(-1)]).astype(f32)   # (D,)
    b_full = jnp.concatenate([b0.reshape(1), b.reshape(-1)]).astype(f32)   # (D,)
    w_pad = jnp.zeros((D_pad,), f32).at[:D].set(w_full)
    b_pad = jnp.zeros((D_pad,), f32).at[:D].set(b_full)
    # W_expand[p, q*D_pad + d] = (p == q) * w_pad[d]
    w_expand = jnp.kron(jnp.eye(P, dtype=f32), w_pad.reshape(1, D_pad))    # (P, PD)
    b_tiled = jnp.tile(b_pad, (P,)).reshape(1, PD)                         # (1, PD)

    # VMEM budget: 2 double-buffered output blocks + 2 tau blocks whose P-wide
    # lane dim is padded to 128 lanes in VMEM.
    out_bytes = jnp.dtype(out_dtype).itemsize
    bytes_per_row = 2 * (PD * out_bytes + 128 * 4)
    vmem_budget = 40 * 1024 * 1024
    cap = max(8, (vmem_budget // bytes_per_row) // 8 * 8)

    TN = _pick_tile(N, min(tn_pref, cap))
    grid = (N // TN,)

    out_packed = pl.pallas_call(
        _make_time2vec_kernel(P, D_pad, out_dtype),
        out_shape=jax.ShapeDtypeStruct((N, PD), out_dtype),
        grid=grid,
        in_specs=[
            pl.BlockSpec((TN, P), lambda i: (i, 0)),
            pl.BlockSpec((P, PD), lambda i: (0, 0)),
            pl.BlockSpec((1, PD), lambda i: (0, 0)),
        ],
        out_specs=pl.BlockSpec((TN, PD), lambda i: (i, 0)),
        compiler_params=pltpu.CompilerParams(
            dimension_semantics=("parallel",),
            vmem_limit_bytes=48 * 1024 * 1024,
        ),
    )(tau_f, w_expand, b_tiled)

    # Contiguous (metadata-only) reshape back to (B, S, D_pad); drop pad lanes.
    out = out_packed.reshape(B, S, D_pad)
    if D_pad != D:
        out = out[..., :D]
    return out


def time2vec_ref(tau, w0, b0, w, b):
    """Pure-JAX reference matching the PyTorch forward exactly."""
    part0 = w0 * tau + b0
    part1 = jnp.sin(tau[:, :, None] * w[None, :, :] + b[None, None, :])
    return jnp.concatenate([part0[:, :, None], part1], axis=-1)


if __name__ == "__main__":
    key = jax.random.PRNGKey(0)
    k_tau, k_w0, k_b0, k_w, k_b = jax.random.split(key, 5)

    # Small shape from the module spec: batch=2, seq=8, embedding_dim=32.
    B, S, D = 2, 8, 32
    tau = jax.random.normal(k_tau, (B, S), dtype=jnp.float32)
    w0 = jax.random.normal(k_w0, (1, 1), dtype=jnp.float32)
    b0 = jax.random.normal(k_b0, (1,), dtype=jnp.float32)
    w = jax.random.normal(k_w, (1, D - 1), dtype=jnp.float32)
    b = jax.random.normal(k_b, (D - 1,), dtype=jnp.float32)

    out = jax.block_until_ready(time2vec(tau, w0, b0, w, b))
    expected = time2vec_ref(tau, w0, b0, w, b)
    assert out.shape == (B, S, D)
    assert jnp.allclose(out, expected, atol=3e-5, rtol=1e-5), "mismatch vs reference"

    # Larger shape exercising the packed (P=4) multi-step tiled grid path.
    B2, S2 = 16, 256
    tau2 = jax.random.normal(k_tau, (B2, S2), dtype=jnp.float32)
    out2 = jax.block_until_ready(time2vec(tau2, w0, b0, w, b))
    expected2 = time2vec_ref(tau2, w0, b0, w, b)
    assert out2.shape == (B2, S2, D)
    assert jnp.allclose(out2, expected2, atol=3e-5, rtol=1e-5), "mismatch vs reference (tiled)"

    # Non-power-of-two D exercises the padded-lane fallback (D=48 -> D_pad=64).
    D3 = 48
    w3 = jax.random.normal(k_w, (1, D3 - 1), dtype=jnp.float32)
    b3 = jax.random.normal(k_b, (D3 - 1,), dtype=jnp.float32)
    out3 = jax.block_until_ready(time2vec(tau2, w0, b0, w3, b3))
    expected3 = time2vec_ref(tau2, w0, b0, w3, b3)
    assert out3.shape == (B2, S2, D3)
    assert jnp.allclose(out3, expected3, atol=3e-5, rtol=1e-5), "mismatch vs reference (padded)"

    print("KERNEL_OK")
</pallas_src>

<mosaic_0001>
module attributes {stable_mosaic.version = 11 : i64} {
  func.func @kernel(%arg0: i32, %arg1: memref<4x4xf32, #tpu.memory_space<vmem>>, %arg2: memref<4x128xf32, #tpu.memory_space<vmem>>, %arg3: memref<1x128xf32, #tpu.memory_space<vmem>>, %arg4: memref<4x128xf32, #tpu.memory_space<vmem>>) attributes {dimension_semantics = [#tpu.dimension_semantics<parallel>], iteration_bounds = array<i64: 1>, scalar_prefetch = 0 : i64, scratch_operands = 0 : i64, tpu.core_type = #tpu.core_type<tc>, window_params = [{transform_indices = @transform_0, window_bounds = array<i64: 4, 4>}, {pipeline_mode = #tpu.pipeline_mode<synchronous>, transform_indices = @transform_1, window_bounds = array<i64: 4, 128>}, {pipeline_mode = #tpu.pipeline_mode<synchronous>, transform_indices = @transform_2, window_bounds = array<i64: 1, 128>}, {transform_indices = @transform_3, window_bounds = array<i64: 4, 128>}]} {
    %c0 = arith.constant 0 : index
    %c0_0 = arith.constant 0 : index
    %0 = vector.load %arg1[%c0, %c0_0] : memref<4x4xf32, #tpu.memory_space<vmem>>, vector<4x4xf32>
    %c0_1 = arith.constant 0 : index
    %c0_2 = arith.constant 0 : index
    %1 = vector.load %arg2[%c0_1, %c0_2] : memref<4x128xf32, #tpu.memory_space<vmem>>, vector<4x128xf32>
    %cst = arith.constant dense<0.000000e+00> : vector<4x128xf32>
    %2 = tpu.matmul %0, %1, %cst {dimension_numbers = #tpu.dot_dimension_numbers<[1], [0], [0], [1], [0, 0, 1, 1], [], []>} : vector<4x4xf32>, vector<4x128xf32>, vector<4x128xf32> -> vector<4x128xf32>
    %c0_3 = arith.constant 0 : index
    %c0_4 = arith.constant 0 : index
    %3 = vector.load %arg3[%c0_3, %c0_4] : memref<1x128xf32, #tpu.memory_space<vmem>>, vector<1x128xf32>
    %4 = vector.broadcast %3 : vector<1x128xf32> to vector<4x128xf32>
    %5 = arith.addf %2, %4 : vector<4x128xf32>
    %6 = tpu.iota {dimensions = array<i32: 1>} : vector<1x128xi32>
    %c31_i32 = arith.constant 31 : i32
    %7 = vector.broadcast %c31_i32 : i32 to vector<1x128xi32>
    %8 = arith.andi %6, %7 : vector<1x128xi32>
    %c0_i32 = arith.constant 0 : i32
    %9 = vector.broadcast %c0_i32 : i32 to vector<1x128xi32>
    %10 = arith.cmpi eq, %8, %9 : vector<1x128xi32>
    %11 = math.sin %5 : vector<4x128xf32>
    %12 = vector.shape_cast %10 : vector<1x128xi1> to vector<1x128xi1>
    %13 = vector.broadcast %12 : vector<1x128xi1> to vector<4x128xi1>
    %14 = arith.select %13, %5, %11 : vector<4x128xi1>, vector<4x128xf32>
    %c0_5 = arith.constant 0 : index
    %c0_6 = arith.constant 0 : index
    %15 = vector.load %arg4[%c0_5, %c0_6] : memref<4x128xf32, #tpu.memory_space<vmem>>, vector<4x128xf32>
    tpu.vector_store %arg4[%c0_5, %c0_6], %14 {strides = array<i32>} : memref<4x128xf32, #tpu.memory_space<vmem>>, vector<4x128xf32>,
    return
  }
  func.func @transform_0(%arg0: i32) -> (i32, i32) {
    %c0_i32 = arith.constant 0 : i32
    %c0_i32_0 = arith.constant 0 : i32
    return %arg0, %c0_i32 : i32, i32
  }
  func.func @transform_1(%arg0: i32) -> (i32, i32) {
    %c0_i32 = arith.constant 0 : i32
    %c0_i32_0 = arith.constant 0 : i32
    %c0_i32_1 = arith.constant 0 : i32
    return %c0_i32, %c0_i32_0 : i32, i32
  }
  func.func @transform_2(%arg0: i32) -> (i32, i32) {
    %c0_i32 = arith.constant 0 : i32
    %c0_i32_0 = arith.constant 0 : i32
    %c0_i32_1 = arith.constant 0 : i32
    return %c0_i32, %c0_i32_0 : i32, i32
  }
  func.func @transform_3(%arg0: i32) -> (i32, i32) {
    %c0_i32 = arith.constant 0 : i32
    %c0_i32_0 = arith.constant 0 : i32
    return %arg0, %c0_i32 : i32, i32
  }
}

</mosaic_0001>

<llo_original>
// kernel: tpu_custom_call.1
$region0: #{tpu_custom_call.1}
  #allocation0 [shape = 'u32[]', space=smem, size = 0x4, offset = 0x4, fixed_abs, tag = 'smem constant byte address 0x4 - core index']
  #allocation1 [shape = 'u32[72,128]{1,0:T(1,128)}', space=vmem, size = 0x9000, scoped, tag = 'internal scratch']
  %s0 = inlined_call_operand.hbm [shape: f32[4,4], index: 0, kind: input, shape index: {}]
  %s1 = inlined_call_operand.hbm [shape: f32[4,128], index: 1, kind: input, shape index: {}]
  %s2 = inlined_call_operand.vmem [shape: f32[1,128], index: 2, kind: input, shape index: {}]
  %s3 = inlined_call_operand.hbm [shape: f32[4,128], index: 3, kind: output, shape index: {}]
  %s4 = sld [smem:[#allocation0]]
  $region30: #{tpu_custom_call.1} parent=0
    _
  %s6 = ssub.s32 1, %s4
  %s7 = scalar_select 0, %s6, %s4
  $region1: #{tpu_custom_call.1} parent=0
    #allocation2 [shape = 'u8[2048]{0}', space=vmem, size = 0x800, scoped, tag = 'input window, operand 0, single buffered']
    #allocation3 [shape = 's32[1]{0}', space=sflag, size = 0x4, scoped, tag = 'scoped memory for tpu_custom_call.1']
    #allocation4 [shape = 's32[1]{0}', space=sflag, size = 0x4, scoped, tag = 'scoped memory for tpu_custom_call.1']
    #allocation5 [shape = 'u8[2048]{0}', space=vmem, size = 0x800, scoped, tag = 'input window, operand 1, single buffered']
    #allocation6 [shape = 's32[1]{0}', space=sflag, size = 0x4, scoped, tag = 'scoped memory for tpu_custom_call.1']
    #allocation7 [shape = 'u8[2048]{0}', space=vmem, size = 0x800, scoped, tag = 'output window, operand 0, single buffered']
    %8 = vsyncpa [#allocation3], 0
    %9 = vsyncpa [#allocation6], 0
    %10 = vsyncpa [#allocation4], 0
    // Predicated region
    $region2: #{tpu_custom_call.1} parent=1 // pred_check
      _
    $region3: #{tpu_custom_call.1} parent=1 // pred_check_branch
      %12 = sbr.rel (0) target = $region5
    $region4: #{tpu_custom_call.1} parent=1 // pred_region
      %14 = vsyncadd [#allocation3], 0
      %s16 = sshll.u32 %s0, 4
      %s17 = int_to_ptr.hbm [resolvable:$true] %s16
      %s18 = sshll.u32 [#allocation2], 4
      %s19 = int_to_ptr.vmem [resolvable:$true] %s18
      %21 = dma.hbm_to_vmem [thread:$0]  %s17, 64, %s19, [#allocation3]
    $region5: #{tpu_custom_call.1} parent=1 // pred_fallthru
      _
    // Predicated region
    $region6: #{tpu_custom_call.1} parent=1 // pred_check
      _
    $region7: #{tpu_custom_call.1} parent=1 // pred_check_branch
      %23 = sbr.rel (0) target = $region9
    $region8: #{tpu_custom_call.1} parent=1 // pred_region
      %25 = vsyncadd [#allocation6], 0
      %s27 = sshll.u32 %s1, 4
      %s28 = int_to_ptr.hbm [resolvable:$true] %s27
      %s29 = sshll.u32 [#allocation5], 4
      %s30 = int_to_ptr.vmem [resolvable:$true] %s29
      %32 = dma.hbm_to_vmem [thread:$0]  %s28, 64, %s30, [#allocation6]
    $region9: #{tpu_custom_call.1} parent=1 // pred_fallthru
      _
    // Predicated region
    $region10: #{tpu_custom_call.1} parent=1 // pred_check
      _
    $region11: #{tpu_custom_call.1} parent=1 // pred_check_branch
      %34 = sbr.rel (0) target = $region13
    $region12: #{tpu_custom_call.1} parent=1 // pred_region
      _
    $region13: #{tpu_custom_call.1} parent=1 // pred_fallthru
      _
    // Predicated region
    $region14: #{tpu_custom_call.1} parent=1 // pred_check
      _
    $region15: #{tpu_custom_call.1} parent=1 // pred_check_branch
      %36 = sbr.rel (0) target = $region17
    $region16: #{tpu_custom_call.1} parent=1 // pred_region
      %38 = dma.done [#allocation3], 64
    $region17: #{tpu_custom_call.1} parent=1 // pred_fallthru
      _
    // Predicated region
    $region18: #{tpu_custom_call.1} parent=1 // pred_check
      _
    $region19: #{tpu_custom_call.1} parent=1 // pred_check_branch
      %40 = sbr.rel (0) target = $region21
    $region20: #{tpu_custom_call.1} parent=1 // pred_region
      %42 = dma.done [#allocation6], 64
    $region21: #{tpu_custom_call.1} parent=1 // pred_fallthru
      _
    %v43 = vld [vmem:[#allocation2] sm:$0xf]
    %v44 = vld [vmem:[#allocation5] sm:$0xf]
    %v45 = vld [vmem:[%s2] sm:$0x1]
    %v47 = vperm.slane %v45, 0
    %vm49 = vcmask 31744
    %v51 = vsel %vm49, %v43, 0
    %vm53 = vcmask 1043456
    %v55 = vsel %vm53, %v44, 0
    %57 = vmatpush.msra.mxu0 0.0
    %58 = vmatpush.msra.mxu0 0.0
    %59 = vmatpush.msra.mxu0 0.0
    %60 = vmatpush.msra.mxu0 0.0
    %61 = vmatpush.msra.mxu0 0.0
    %62 = vmatpush.msra.mxu0 0.0
    %63 = vmatpush.msra.mxu0 0.0
    %64 = vmatpush.msra.mxu0 0.0
    %65 = vmatpush.msra.mxu0 0.0
    %66 = vmatpush.msra.mxu0 0.0
    %67 = vmatpush.msra.mxu0 0.0
    %68 = vmatpush.msra.mxu0 0.0
    %69 = vmatpush.msra.mxu0 0.0
    %70 = vmatpush.msra.mxu0 0.0
    %71 = vmatpush.msra.mxu0 0.0
    %72 = vmatpush.msra.mxu0 %v55
    %73 = vmatmul.f32.gmra.mxu0 %v51
    %v74 = vpop.f32.mrf.mxu0
    %v75 = vadd.f32 %v47, %v74
    %76 = vdwg.mxu0
    %v77 = vlaneseq
    %v78 = vand.u32 %v77, 127
    %v79 = vand.u32 %v78, 31
    %vm80 = vcmp.eq.s32.totalorder %v79, 0
    %v81 = vand.u32 2147483647, %v75
    %vm82 = vcmp.le.f32.partialorder %v81, 0.7853982
    %vm83 = vcmp.lt.s32.totalorder %v75, 0
    %v84 = vand.u32 %v75, 2139095040
    %v85 = vshrl.u32 %v84, 23
    %v86 = vsub.s32 %v85, 127
    %v87 = vand.u32 2147483647, %v75
    %v88 = vand.u32 %v87, 8388607
    %v89 = vor.u32 %v88, 8388608
    %v90 = vsub.s32 0, %v89
    %v91 = vadd.s32 %v86, 1
    %vm92 = vcmp.gt.s32.totalorder %v91, 0
    %v93 = vsel %vm92, %v91, 0
    %v94 = vshrl.u32 %v93, 5
    %v95 = vand.u32 %v93, 31
    %v96 = vsub.s32 32, %v95
    %v97 = vshrl.u32 683565275, %v96
    %v98 = vshll.u32 683565275, %v95
    %v99 = vshrl.u32 2475754826, %v96
    %v100 = vor.u32 %v98, %v99
    %v101 = vshll.u32 2475754826, %v95
    %v102 = vshrl.u32 2131351028, %v96
    %v103 = vor.u32 %v101, %v102
    %v104 = vshll.u32 2131351028, %v95
    %v105 = vshrl.u32 2102212464, %v96
    %v106 = vor.u32 %v104, %v105
    %v107 = vshll.u32 2102212464, %v95
    %v108 = vshrl.u32 920167782, %v96
    %v109 = vor.u32 %v107, %v108
    %v110 = vshll.u32 920167782, %v95
    %v111 = vshrl.u32 1326507024, %v96
    %v112 = vor.u32 %v110, %v111
    %vm113 = vcmp.lt.s32.totalorder %v94, 1
    %vm114 = vcmp.lt.s32.totalorder %v94, 2
    %vm115 = vcmp.lt.s32.totalorder %v94, 3
    %vm116 = vcmp.lt.s32.totalorder %v94, 4
    %v117 = vsel %vm113, %v97, %v100
    %v118 = vsel %vm116, %v106, 2102212464
    %v119 = vsel %vm115, %v103, %v118
    %v120 = vsel %vm114, %v117, %v119
    %v121 = vsel %vm113, %v100, %v103
    %v122 = vsel %vm116, %v109, 920167782
    %v123 = vsel %vm115, %v106, %v122
    %v124 = vsel %vm114, %v121, %v123
    %v125 = vsel %vm113, %v103, %v106
    %v126 = vsel %vm116, %v112, 1326507024
    %v127 = vsel %vm115, %v109, %v126
    %v128 = vsel %vm114, %v125, %v127
    %v129 = vshll.u32 %v89, 8
    %v130 = vand.u32 %v129, 65535
    %v131 = vshrl.u32 %v129, 16
    %v132 = vand.u32 %v128, 65535
    %v133 = vshrl.u32 %v128, 16
    %v134 = vmul.u32 %v130, %v132
    %v135 = vmul.u32 %v130, %v133
    %v136 = vmul.u32 %v131, %v132
    %v137 = vmul.u32 %v131, %v133
    %v138 = vshll.u32 %v135, 16
    %v139 = vshrl.u32 %v135, 16
    %v140 = vshll.u32 %v136, 16
    %v141 = vshrl.u32 %v136, 16
    %vm142 = vc.u32 %v134, %v138
    %v143 = vsel %vm142, 1, 0
    %v144 = vadd.s32 %v134, %v138
    %v145 = vadd.s32 %v137, %v143
    %vm146 = vc.u32 %v144, %v140
    %v147 = vsel %vm146, 1, 0
    %v148 = vadd.s32 %v144, %v140
    %v149 = vadd.s32 %v145, %v147
    %v150 = vadd.s32 %v149, %v139
    %v151 = vadd.s32 %v150, %v141
    %v152 = vand.u32 %v129, 65535
    %v153 = vshrl.u32 %v129, 16
    %v154 = vand.u32 %v124, 65535
    %v155 = vshrl.u32 %v124, 16
    %v156 = vmul.u32 %v152, %v154
    %v157 = vmul.u32 %v152, %v155
    %v158 = vmul.u32 %v153, %v154
    %v159 = vmul.u32 %v153, %v155
    %v160 = vshll.u32 %v157, 16
    %v161 = vshrl.u32 %v157, 16
    %v162 = vshll.u32 %v158, 16
    %v163 = vshrl.u32 %v158, 16
    %vm164 = vc.u32 %v156, %v160
    %v165 = vsel %vm164, 1, 0
    %v166 = vadd.s32 %v156, %v160
    %v167 = vadd.s32 %v159, %v165
    %vm168 = vc.u32 %v166, %v162
    %v169 = vsel %vm168, 1, 0
    %v170 = vadd.s32 %v166, %v162
    %v171 = vadd.s32 %v167, %v169
    %v172 = vadd.s32 %v171, %v161
    %v173 = vadd.s32 %v172, %v163
    %v174 = vmul.u32 %v129, %v120
    %v175 = vadd.s32 %v151, %v170
    %vm176 = vc.u32 %v151, %v170
    %v177 = vadd.s32 %v173, 1
    %v178 = vsel %vm176, %v177, %v173
    %v179 = vadd.s32 %v174, %v178
    %v180 = vadd.s32 %v179, 536870912
    %v181 = vshrl.u32 %v180, 30
    %v182 = vshll.u32 %v181, 30
    %v183 = vsub.s32 %v179, %v182
    %vm184 = vcmp.lt.s32.totalorder %v183, 0
    %v185 = vsub.s32 0, %v183
    %v186 = vsel %vm184, %v185, %v183
    %v187 = vclz %v186
    %v188 = vsub.s32 %v187, 2
    %vm189 = vcmp.gt.s32.totalorder 0, %v188
    %v190 = vsel %vm189, 0, %v188
    %v191 = vsub.s32 32, %v190
    %v192 = vshll.u32 %v183, %v190
    %v193 = vshrl.u32 %v175, %v191
    %v194 = vor.u32 %v192, %v193
    %v195 = vsub.s32 4294967266, %v190
    %v196 = vadd.s32 %v195, 127
    %v197 = vshll.u32 %v196, 23
    %v198 = vor.u32 4788187, %v197
    %v199 = vand.u32 2147483647, %v198
    %v201 = vcvt.s32.f32 %v194
    %v202 = vmul.f32 %v201, %v199
    %v203 = vxor.u32 %v202, 2147483648
    %v204 = vsel %vm83, %v203, %v202
    %v205 = vsub.s32 4, %v181
    %v206 = vsel %vm83, %v205, %v181
    %v207 = vsel %vm82, %v75, %v204
    %v208 = vsel %vm82, 0, %v206
    %v209 = vmul.f32 %v207, %v207
    %v210 = vmul.f32 %v209, -0.001358992
    %v211 = vadd.f32 %v210, 0.041655596
    %v212 = vmul.f32 %v209, %v211
    %v213 = vadd.f32 %v212, -0.4999988
    %v214 = vmul.f32 %v209, %v213
    %v215 = vadd.f32 1.0, %v214
    %v216 = vmul.f32 %v207, %v207
    %v217 = vmul.f32 %v216, -0.00019511016
    %v218 = vadd.f32 %v217, 0.008332121
    %v219 = vmul.f32 %v216, %v218
    %v220 = vadd.f32 %v219, -0.16666654
    %v221 = vmul.f32 %v216, %v220
    %v222 = vadd.f32 %v221, 1.0
    %v223 = vmul.f32 %v222, %v207
    %vm224 = vweird.f32 %v75
    %v225 = vadd.s32 %v208, 3
    %v226 = vand.u32 %v225, 3
    %vm227 = vcmp.lt.s32.totalorder %v226, 2
    %vm228 = vcmp.eq.s32.totalorder %v226, 0
    %v229 = vxor.u32 %v223, 2147483648
    %v230 = vsel %vm228, %v215, %v229
    %vm231 = vcmp.eq.s32.totalorder %v226, 2
    %v232 = vxor.u32 %v215, 2147483648
    %v233 = vsel %vm231, %v232, %v223
    %v234 = vsel %vm227, %v230, %v233
    %v235 = vsel %vm224, nan, %v234
    %v236 = vsel %vm80, 1, 0
    %vm237 = vcmp.eq.s32.totalorder %v236, 1
    %v238 = vsel %vm237, %v75, %v235
    %239 = vst [vmem:[#allocation7] sm:$0xf] %v238
    // Predicated region
    $region22: #{tpu_custom_call.1} parent=1 // pred_check
      _
    $region23: #{tpu_custom_call.1} parent=1 // pred_check_branch
      %241 = sbr.rel (0) target = $region25
    $region24: #{tpu_custom_call.1} parent=1 // pred_region
      %243 = vsyncadd [#allocation4], 0
      %s245 = sshll.u32 [#allocation7], 4
      %s246 = int_to_ptr.vmem [resolvable:$true] %s245
      %s247 = sshll.u32 %s3, 4
      %s248 = int_to_ptr.hbm [resolvable:$true] %s247
      %250 = dma.vmem_to_hbm [thread:$0]  %s246, 64, %s248, [#allocation4]
    $region25: #{tpu_custom_call.1} parent=1 // pred_fallthru
      _
    // Predicated region
    $region26: #{tpu_custom_call.1} parent=1 // pred_check
      _
    $region27: #{tpu_custom_call.1} parent=1 // pred_check_branch
      %252 = sbr.rel (0) target = $region29
    $region28: #{tpu_custom_call.1} parent=1 // pred_region
      %254 = dma.done [#allocation4], 64
    $region29: #{tpu_custom_call.1} parent=1 // pred_fallthru
      _
    %255 = vsyncpa [#allocation3], 1
    %256 = vsyncpa [#allocation6], 1
    %257 = vsyncpa [#allocation4], 1

</llo_original>
